<compile_context>
chip_gen: v5e
topology: v5e:2x2
jax: 0.10.0
libtpu: 0.0.40
codegen_flags: <defaults>
</compile_context>

<pallas_src>
import functools

import jax
import jax.numpy as jnp
from jax import lax
from jax.experimental import pallas as pl
from jax.experimental.pallas import tpu as pltpu

_LANE = 128
_SUBLANE = 8
_CORE_SPLITS = 2        # v7x has 2 TensorCores; harmless (serial) on v5e/v6e
_MAX_ROWS_32 = 4096     # 2 MiB per f32 input tile  -> ~8 MiB double-buffered
_MAX_ROWS_16 = 8192     # 2 MiB per bf16 input tile


def _tdice_kernel(o_ref, t_ref, out_ref, *, rows, block_rows, total_blocks,
                  blocks_per_core, dice_weight, binary_targets,
                  has_partial_block, needs_block_gate):
    """Accumulate per-core partial sums into a resident (4, 8, 128) block.

    out_ref rows: [0]=sum(t*log(o)+(1-t)*log(1-o)) (un-negated BCE),
                  [1]=intersection, [2]=output_sum, [3]=target_sum.
    """
    c = pl.program_id(0)          # core split (parallel)
    i = pl.program_id(1)          # row block within split (arbitrary)
    lb = c * blocks_per_core + i  # linear row-block id

    @pl.when(i == 0)
    def _init():
        out_ref[...] = jnp.zeros_like(out_ref)

    def _fold(x):
        # (block_rows, 128) -> (8, 128) partial sums: pure VPU vreg adds.
        return jnp.sum(x.reshape(block_rows // _SUBLANE, _SUBLANE, _LANE),
                       axis=0)

    def _accumulate(mask):
        o = o_ref[...].astype(jnp.float32)
        t = t_ref[...].astype(jnp.float32)
        if mask is not None:
            # Select BEFORE the logs so garbage in the implicitly padded tail
            # rows can never poison the sums (NaN never enters arithmetic).
            o_safe = jnp.where(mask, o, 0.5)
            t = jnp.where(mask, t, 0.0)
            o_for_sums = jnp.where(mask, o, 0.0)
        else:
            o_safe = o
            o_for_sums = o

        if binary_targets:
            # Single-log fast path (t in {0,1}): p == o if t==1 else 1-o.
            p = 1.0 - o_safe - t + 2.0 * o_safe * t
            s = jnp.maximum(jnp.log(p), -100.0)
        else:
            log_o = jnp.maximum(jnp.log(o_safe), -100.0)       # BCELoss clamp
            log_1mo = jnp.maximum(jnp.log(1.0 - o_safe), -100.0)
            # Un-negated BCE term, factored to save one multiply per element.
            s = log_1mo + t * (log_o - log_1mo)
        if mask is not None:
            s = jnp.where(mask, s, 0.0)

        out_ref[0] += _fold(s)
        if dice_weight:           # static Python gate (== `if self.dice_weight:`)
            is_one = t == 1.0     # (targets == 1)
            out_ref[1] += _fold(jnp.where(is_one, o_for_sums, 0.0))
            out_ref[2] += _fold(o_for_sums)
            out_ref[3] += _fold(jnp.where(is_one, 1.0, 0.0))

    def _unmasked():
        _accumulate(None)

    def _masked():
        row = lax.broadcasted_iota(jnp.int32, (block_rows, _LANE), 0)
        mask = row < (rows - lb * block_rows)
        _accumulate(mask)

    if not has_partial_block and not needs_block_gate:
        _unmasked()
    elif not has_partial_block:
        # Only need to skip the overhang blocks of the uneven core split.
        pl.when(lb < total_blocks)(_unmasked)
    else:
        is_tail = lb == total_blocks - 1
        not_tail = jnp.logical_not(is_tail)
        if needs_block_gate:
            not_tail = jnp.logical_and(not_tail, lb < total_blocks)
        pl.when(not_tail)(_unmasked)
        pl.when(is_tail)(_masked)


def _partial_sums_jax(o, t):
    """Pure-JAX partial sums for the (tiny) non-lane-aligned remainder."""
    o = o.astype(jnp.float32)
    t = t.astype(jnp.float32)
    log_o = jnp.maximum(jnp.log(o), -100.0)
    log_1mo = jnp.maximum(jnp.log(1.0 - o), -100.0)
    s = jnp.sum(log_1mo + t * (log_o - log_1mo))
    is_one = t == 1.0
    inter = jnp.sum(jnp.where(is_one, o, 0.0))
    osum = jnp.sum(o)
    tsum = jnp.sum(is_one.astype(jnp.float32))
    return s, inter, osum, tsum


def tdice_loss(outputs, targets, dice_weight=1, binary_targets=False,
               max_block_rows=None):
    """Pallas implementation of TDiceLoss.forward(outputs, targets)."""
    assert outputs.shape == targets.shape
    n = int(outputs.size)
    assert n > 0

    o_flat = outputs.reshape(-1)
    t_flat = targets.reshape(-1)

    rows = n // _LANE                       # full 128-lane rows
    use_kernel = rows >= 2 * _SUBLANE       # need at least one 16-row block
    n_bulk = rows * _LANE if use_kernel else 0

    s_sum = jnp.float32(0.0)
    inter_sum = jnp.float32(0.0)
    o_sum = jnp.float32(0.0)
    t_sum = jnp.float32(0.0)

    if use_kernel:
        if max_block_rows is None:
            max_block_rows = (_MAX_ROWS_16 if outputs.dtype.itemsize <= 2
                              else _MAX_ROWS_32)
        max_block_rows = max(16, (max_block_rows // 16) * 16)
        block_rows = max(16, min(max_block_rows, (rows // 16) * 16))
        total_blocks = -(-rows // block_rows)
        num_splits = min(_CORE_SPLITS, total_blocks)
        blocks_per_core = -(-total_blocks // num_splits)
        needs_block_gate = num_splits * blocks_per_core > total_blocks
        has_partial_block = (rows % block_rows) != 0

        # Lane-dense bulk view; no jnp.pad and no block-granularity rounding.
        o2 = (o_flat[:n_bulk] if n_bulk != n else o_flat).reshape(rows, _LANE)
        t2 = (t_flat[:n_bulk] if n_bulk != n else t_flat).reshape(rows, _LANE)

        if needs_block_gate:
            def _in_map(c, i):
                return (jnp.minimum(c * blocks_per_core + i, total_blocks - 1), 0)
        else:
            def _in_map(c, i):
                return (c * blocks_per_core + i, 0)

        kernel = functools.partial(
            _tdice_kernel,
            rows=rows, block_rows=block_rows, total_blocks=total_blocks,
            blocks_per_core=blocks_per_core, dice_weight=bool(dice_weight),
            binary_targets=bool(binary_targets),
            has_partial_block=has_partial_block,
            needs_block_gate=needs_block_gate)

        itemsize_bytes = outputs.dtype.itemsize + targets.dtype.itemsize
        cost = pl.CostEstimate(
            flops=12 * n_bulk,
            transcendentals=(1 if binary_targets else 2) * n_bulk,
            bytes_accessed=n_bulk * itemsize_bytes
                           + num_splits * 4 * _SUBLANE * _LANE * 4)

        partials = pl.pallas_call(
            kernel,
            out_shape=jax.ShapeDtypeStruct(
                (num_splits, 4, _SUBLANE, _LANE), jnp.float32),
            grid=(num_splits, blocks_per_core),
            in_specs=[pl.BlockSpec((block_rows, _LANE), _in_map),
                      pl.BlockSpec((block_rows, _LANE), _in_map)],
            out_specs=pl.BlockSpec((None, 4, _SUBLANE, _LANE),
                                   lambda c, i: (c, 0, 0, 0)),
            compiler_params=pltpu.CompilerParams(
                dimension_semantics=("parallel", "arbitrary"),
                vmem_limit_bytes=32 * 1024 * 1024),
            cost_estimate=cost,
        )(o2, t2)

        psum = jnp.sum(partials, axis=(0, 2, 3))   # (4,) f32
        s_sum = s_sum + psum[0]
        inter_sum = inter_sum + psum[1]
        o_sum = o_sum + psum[2]
        t_sum = t_sum + psum[3]

    if n_bulk != n:   # sub-128-element remainder (or everything if tiny input)
        ts, ti, to, tt = _partial_sums_jax(o_flat[n_bulk:], t_flat[n_bulk:])
        s_sum = s_sum + ts
        inter_sum = inter_sum + ti
        o_sum = o_sum + to
        t_sum = t_sum + tt

    loss = -s_sum / jnp.float32(n)             # BCELoss reduction='mean'
    if dice_weight:
        eps = 1e-15
        intersection = inter_sum + eps
        union = o_sum + t_sum + eps
        # Matches the original module: the dice term is added unweighted;
        # dice_weight only gates whether it is added.
        loss = loss + (1.0 - jnp.log(2.0 * intersection / union))
    return loss


def _tdice_loss_ref(outputs, targets, dice_weight=1):
    """Pure-JAX reference mirroring the PyTorch module."""
    o = outputs.astype(jnp.float32)
    t = targets.astype(jnp.float32)
    log_o = jnp.maximum(jnp.log(o), -100.0)
    log_1mo = jnp.maximum(jnp.log(1.0 - o), -100.0)
    loss = jnp.mean(-(t * log_o + (1.0 - t) * log_1mo))
    if dice_weight:
        eps = 1e-15
        dice_target = (t == 1.0).astype(jnp.float32)
        intersection = jnp.sum(o * dice_target) + eps
        union = jnp.sum(o) + jnp.sum(dice_target) + eps
        loss = loss + (1.0 - jnp.log(2.0 * intersection / union))
    return loss


if __name__ == "__main__":
    key = jax.random.PRNGKey(0)
    ks = jax.random.split(key, 10)

    def _mk(shape, k1, k2, dtype=jnp.float32):
        outputs = jax.nn.sigmoid(
            jax.random.normal(k1, shape, jnp.float32)).astype(dtype)
        targets = (jax.random.uniform(k2, shape) > 0.5).astype(dtype)
        return outputs, targets

    def _run(outputs, targets, dice_weight=1, rtol=1e-5, atol=1e-5, **kw):
        loss = jax.block_until_ready(
            tdice_loss(outputs, targets, dice_weight=dice_weight, **kw))
        ref = jax.block_until_ready(
            _tdice_loss_ref(outputs, targets, dice_weight=dice_weight))
        assert jnp.isfinite(loss), f"non-finite loss: {loss}"
        assert jnp.allclose(loss, ref, rtol=rtol, atol=atol), (loss, ref)

    # 1) lane-aligned NCHW, single block, no masking; dice on/off; fast path.
    o1, t1 = _mk((2, 4, 16, 16), ks[0], ks[1])
    _run(o1, t1, dice_weight=1)
    _run(o1, t1, dice_weight=0)
    _run(o1, t1, dice_weight=1, binary_targets=True, rtol=1e-4, atol=1e-4)

    # 2) tiny ragged size: handled by the plain-JAX remainder path.
    o2, t2 = _mk((2, 3, 7, 5), ks[2], ks[3])
    _run(o2, t2, dice_weight=1)

    # 3) multi-block + 2-way core split + uneven split + partial tail block
    #    + sub-128 remainder (block size forced small to exercise the paths
    #    at a small shape).
    o3, t3 = _mk((2, 4, 20, 161), ks[4], ks[5])
    _run(o3, t3, dice_weight=1, max_block_rows=16)

    # 4) bf16 inputs (16-row packed tiles, in-kernel cast to f32).
    o4, t4 = _mk((2, 4, 16, 16), ks[6], ks[7], dtype=jnp.bfloat16)
    _run(o4, t4, dice_weight=1)

    print("KERNEL_OK")
</pallas_src>

<mosaic_0001>
module attributes {stable_mosaic.version = 11 : i64} {
  func.func @_tdice_kernel(%arg0: i32, %arg1: i32, %arg2: memref<16x128xf32, #tpu.memory_space<vmem>>, %arg3: memref<16x128xf32, #tpu.memory_space<vmem>>, %arg4: memref<1x4x8x128xf32, #tpu.memory_space<vmem>>) attributes {dimension_semantics = [#tpu.dimension_semantics<parallel>, #tpu.dimension_semantics<arbitrary>], iteration_bounds = array<i64: 1, 1>, scalar_prefetch = 0 : i64, scratch_operands = 0 : i64, tpu.core_type = #tpu.core_type<tc>, window_params = [{transform_indices = @transform_0, window_bounds = array<i64: 16, 128>}, {transform_indices = @transform_1, window_bounds = array<i64: 16, 128>}, {transform_indices = @transform_2, window_bounds = array<i64: 1, 4, 8, 128>}]} {
    %c0_i32 = arith.constant 0 : i32
    %0 = arith.cmpi eq, %arg1, %c0_i32 : i32
    %1 = arith.extui %0 : i1 to i32
    %c0_i32_0 = arith.constant 0 : i32
    %2 = arith.cmpi ne, %1, %c0_i32_0 : i32
    scf.if %2 {
      %cst_43 = arith.constant 0.000000e+00 : f32
      %55 = vector.broadcast %cst_43 : f32 to vector<4x8x128xf32>
      %c0_44 = arith.constant 0 : index
      %c0_45 = arith.constant 0 : index
      %c0_46 = arith.constant 0 : index
      %c0_47 = arith.constant 0 : index
      %56 = vector.load %arg4[%c0_44, %c0_45, %c0_46, %c0_47] : memref<1x4x8x128xf32, #tpu.memory_space<vmem>>, vector<1x4x8x128xf32>
      %57 = vector.shape_cast %56 : vector<1x4x8x128xf32> to vector<4x8x128xf32>
      %58 = vector.shape_cast %55 : vector<4x8x128xf32> to vector<1x4x8x128xf32>
      tpu.vector_store %arg4[%c0_44, %c0_45, %c0_46, %c0_47], %58 {strides = array<i32>} : memref<1x4x8x128xf32, #tpu.memory_space<vmem>>, vector<1x4x8x128xf32>,
    } else {
    }
    %c0 = arith.constant 0 : index
    %c0_1 = arith.constant 0 : index
    %3 = vector.load %arg2[%c0, %c0_1] : memref<16x128xf32, #tpu.memory_space<vmem>>, vector<16x128xf32>
    %c0_2 = arith.constant 0 : index
    %c0_3 = arith.constant 0 : index
    %4 = vector.load %arg3[%c0_2, %c0_3] : memref<16x128xf32, #tpu.memory_space<vmem>>, vector<16x128xf32>
    %5 = math.log %3 : vector<16x128xf32>
    %cst = arith.constant -1.000000e+02 : f32
    %6 = vector.broadcast %cst : f32 to vector<16x128xf32>
    %7 = arith.maximumf %5, %6 : vector<16x128xf32>
    %cst_4 = arith.constant 1.000000e+00 : f32
    %8 = vector.broadcast %cst_4 : f32 to vector<16x128xf32>
    %9 = arith.subf %8, %3 : vector<16x128xf32>
    %10 = math.log %9 : vector<16x128xf32>
    %cst_5 = arith.constant -1.000000e+02 : f32
    %11 = vector.broadcast %cst_5 : f32 to vector<16x128xf32>
    %12 = arith.maximumf %10, %11 : vector<16x128xf32>
    %13 = arith.subf %7, %12 : vector<16x128xf32>
    %14 = arith.mulf %4, %13 : vector<16x128xf32>
    %15 = arith.addf %12, %14 : vector<16x128xf32>
    %c0_6 = arith.constant 0 : index
    %c0_7 = arith.constant 0 : index
    %c0_8 = arith.constant 0 : index
    %c0_9 = arith.constant 0 : index
    %16 = vector.load %arg4[%c0_6, %c0_7, %c0_8, %c0_9] : memref<1x4x8x128xf32, #tpu.memory_space<vmem>>, vector<1x1x8x128xf32>
    %17 = vector.shape_cast %16 : vector<1x1x8x128xf32> to vector<8x128xf32>
    %18 = vector.shape_cast %15 : vector<16x128xf32> to vector<2x8x128xf32>
    %cst_10 = arith.constant dense<0.000000e+00> : vector<8x128xf32>
    %19 = vector.multi_reduction <add>, %18, %cst_10 [0] : vector<2x8x128xf32> to vector<8x128xf32>
    %20 = arith.addf %17, %19 : vector<8x128xf32>
    %c0_11 = arith.constant 0 : index
    %c0_12 = arith.constant 0 : index
    %c0_13 = arith.constant 0 : index
    %c0_14 = arith.constant 0 : index
    %21 = vector.load %arg4[%c0_11, %c0_12, %c0_13, %c0_14] : memref<1x4x8x128xf32, #tpu.memory_space<vmem>>, vector<1x1x8x128xf32>
    %22 = vector.shape_cast %21 : vector<1x1x8x128xf32> to vector<8x128xf32>
    %23 = vector.shape_cast %20 : vector<8x128xf32> to vector<1x1x8x128xf32>
    tpu.vector_store %arg4[%c0_11, %c0_12, %c0_13, %c0_14], %23 {strides = array<i32>} : memref<1x4x8x128xf32, #tpu.memory_space<vmem>>, vector<1x1x8x128xf32>,
    %cst_15 = arith.constant 1.000000e+00 : f32
    %24 = vector.broadcast %cst_15 : f32 to vector<16x128xf32>
    %25 = arith.cmpf oeq, %4, %24 : vector<16x128xf32>
    %c0_16 = arith.constant 0 : index
    %c1 = arith.constant 1 : index
    %c0_17 = arith.constant 0 : index
    %c0_18 = arith.constant 0 : index
    %26 = vector.load %arg4[%c0_16, %c1, %c0_17, %c0_18] : memref<1x4x8x128xf32, #tpu.memory_space<vmem>>, vector<1x1x8x128xf32>
    %27 = vector.shape_cast %26 : vector<1x1x8x128xf32> to vector<8x128xf32>
    %cst_19 = arith.constant 0.000000e+00 : f32
    %28 = vector.broadcast %cst_19 : f32 to vector<16x128xf32>
    %29 = arith.select %25, %3, %28 : vector<16x128xi1>, vector<16x128xf32>
    %30 = vector.shape_cast %29 : vector<16x128xf32> to vector<2x8x128xf32>
    %cst_20 = arith.constant dense<0.000000e+00> : vector<8x128xf32>
    %31 = vector.multi_reduction <add>, %30, %cst_20 [0] : vector<2x8x128xf32> to vector<8x128xf32>
    %32 = arith.addf %27, %31 : vector<8x128xf32>
    %c0_21 = arith.constant 0 : index
    %c1_22 = arith.constant 1 : index
    %c0_23 = arith.constant 0 : index
    %c0_24 = arith.constant 0 : index
    %33 = vector.load %arg4[%c0_21, %c1_22, %c0_23, %c0_24] : memref<1x4x8x128xf32, #tpu.memory_space<vmem>>, vector<1x1x8x128xf32>
    %34 = vector.shape_cast %33 : vector<1x1x8x128xf32> to vector<8x128xf32>
    %35 = vector.shape_cast %32 : vector<8x128xf32> to vector<1x1x8x128xf32>
    tpu.vector_store %arg4[%c0_21, %c1_22, %c0_23, %c0_24], %35 {strides = array<i32>} : memref<1x4x8x128xf32, #tpu.memory_space<vmem>>, vector<1x1x8x128xf32>,
    %c0_25 = arith.constant 0 : index
    %c2 = arith.constant 2 : index
    %c0_26 = arith.constant 0 : index
    %c0_27 = arith.constant 0 : index
    %36 = vector.load %arg4[%c0_25, %c2, %c0_26, %c0_27] : memref<1x4x8x128xf32, #tpu.memory_space<vmem>>, vector<1x1x8x128xf32>
    %37 = vector.shape_cast %36 : vector<1x1x8x128xf32> to vector<8x128xf32>
    %38 = vector.shape_cast %3 : vector<16x128xf32> to vector<2x8x128xf32>
    %cst_28 = arith.constant dense<0.000000e+00> : vector<8x128xf32>
    %39 = vector.multi_reduction <add>, %38, %cst_28 [0] : vector<2x8x128xf32> to vector<8x128xf32>
    %40 = arith.addf %37, %39 : vector<8x128xf32>
    %c0_29 = arith.constant 0 : index
    %c2_30 = arith.constant 2 : index
    %c0_31 = arith.constant 0 : index
    %c0_32 = arith.constant 0 : index
    %41 = vector.load %arg4[%c0_29, %c2_30, %c0_31, %c0_32] : memref<1x4x8x128xf32, #tpu.memory_space<vmem>>, vector<1x1x8x128xf32>
    %42 = vector.shape_cast %41 : vector<1x1x8x128xf32> to vector<8x128xf32>
    %43 = vector.shape_cast %40 : vector<8x128xf32> to vector<1x1x8x128xf32>
    tpu.vector_store %arg4[%c0_29, %c2_30, %c0_31, %c0_32], %43 {strides = array<i32>} : memref<1x4x8x128xf32, #tpu.memory_space<vmem>>, vector<1x1x8x128xf32>,
    %c0_33 = arith.constant 0 : index
    %c3 = arith.constant 3 : index
    %c0_34 = arith.constant 0 : index
    %c0_35 = arith.constant 0 : index
    %44 = vector.load %arg4[%c0_33, %c3, %c0_34, %c0_35] : memref<1x4x8x128xf32, #tpu.memory_space<vmem>>, vector<1x1x8x128xf32>
    %45 = vector.shape_cast %44 : vector<1x1x8x128xf32> to vector<8x128xf32>
    %cst_36 = arith.constant 1.000000e+00 : f32
    %cst_37 = arith.constant 0.000000e+00 : f32
    %46 = vector.broadcast %cst_36 : f32 to vector<16x128xf32>
    %47 = vector.broadcast %cst_37 : f32 to vector<16x128xf32>
    %48 = arith.select %25, %46, %47 : vector<16x128xi1>, vector<16x128xf32>
    %49 = vector.shape_cast %48 : vector<16x128xf32> to vector<2x8x128xf32>
    %cst_38 = arith.constant dense<0.000000e+00> : vector<8x128xf32>
    %50 = vector.multi_reduction <add>, %49, %cst_38 [0] : vector<2x8x128xf32> to vector<8x128xf32>
    %51 = arith.addf %45, %50 : vector<8x128xf32>
    %c0_39 = arith.constant 0 : index
    %c3_40 = arith.constant 3 : index
    %c0_41 = arith.constant 0 : index
    %c0_42 = arith.constant 0 : index
    %52 = vector.load %arg4[%c0_39, %c3_40, %c0_41, %c0_42] : memref<1x4x8x128xf32, #tpu.memory_space<vmem>>, vector<1x1x8x128xf32>
    %53 = vector.shape_cast %52 : vector<1x1x8x128xf32> to vector<8x128xf32>
    %54 = vector.shape_cast %51 : vector<8x128xf32> to vector<1x1x8x128xf32>
    tpu.vector_store %arg4[%c0_39, %c3_40, %c0_41, %c0_42], %54 {strides = array<i32>} : memref<1x4x8x128xf32, #tpu.memory_space<vmem>>, vector<1x1x8x128xf32>,
    return
  }
  func.func @transform_0(%arg0: i32, %arg1: i32) -> (i32, i32) {
    %c1_i32 = arith.constant 1 : i32
    %0 = arith.muli %arg0, %c1_i32 : i32
    %1 = arith.addi %0, %arg1 : i32
    %c0_i32 = arith.constant 0 : i32
    %c0_i32_0 = arith.constant 0 : i32
    return %1, %c0_i32 : i32, i32
  }
  func.func @transform_1(%arg0: i32, %arg1: i32) -> (i32, i32) {
    %c1_i32 = arith.constant 1 : i32
    %0 = arith.muli %arg0, %c1_i32 : i32
    %1 = arith.addi %0, %arg1 : i32
    %c0_i32 = arith.constant 0 : i32
    %c0_i32_0 = arith.constant 0 : i32
    return %1, %c0_i32 : i32, i32
  }
  func.func @transform_2(%arg0: i32, %arg1: i32) -> (i32, i32, i32, i32) {
    %c0_i32 = arith.constant 0 : i32
    %c0_i32_0 = arith.constant 0 : i32
    %c0_i32_1 = arith.constant 0 : i32
    %c0_i32_2 = arith.constant 0 : i32
    return %arg0, %c0_i32, %c0_i32_0, %c0_i32_1 : i32, i32, i32, i32
  }
}

</mosaic_0001>

<llo_original>
// kernel: tpu_custom_call.1
$region0: #{tpu_custom_call.1}
  #allocation0 [shape = 'u32[]', space=smem, size = 0x4, offset = 0x4, fixed_abs, tag = 'smem constant byte address 0x4 - core index']
  #allocation1 [shape = 'u32[72,128]{1,0:T(1,128)}', space=vmem, size = 0x9000, scoped, tag = 'internal scratch']
  %s0 = inlined_call_operand.hbm [shape: f32[16,128], index: 0, kind: input, shape index: {}]
  %s1 = inlined_call_operand.hbm [shape: f32[16,128], index: 1, kind: input, shape index: {}]
  %s2 = inlined_call_operand.hbm [shape: f32[1,4,8,128], index: 2, kind: output, shape index: {}]
  %s3 = sld [smem:[#allocation0]]
  $region30: #{tpu_custom_call.1} parent=0
    _
  %s5 = ssub.s32 1, %s3
  %s6 = scalar_select 0, %s5, %s3
  $region1: #{tpu_custom_call.1} parent=0
    #allocation2 [shape = 'u8[8192]{0}', space=vmem, size = 0x2000, scoped, tag = 'input window, operand 0, single buffered']
    #allocation3 [shape = 's32[1]{0}', space=sflag, size = 0x4, scoped, tag = 'scoped memory for tpu_custom_call.1']
    #allocation4 [shape = 's32[1]{0}', space=sflag, size = 0x4, scoped, tag = 'scoped memory for tpu_custom_call.1']
    #allocation5 [shape = 'u8[8192]{0}', space=vmem, size = 0x2000, scoped, tag = 'input window, operand 1, single buffered']
    #allocation6 [shape = 's32[1]{0}', space=sflag, size = 0x4, scoped, tag = 'scoped memory for tpu_custom_call.1']
    #allocation7 [shape = 'u8[16384]{0}', space=vmem, size = 0x4000, scoped, tag = 'output window, operand 0, single buffered']
    %7 = vsyncpa [#allocation3], 0
    %8 = vsyncpa [#allocation6], 0
    %9 = vsyncpa [#allocation4], 0
    // Predicated region
    $region2: #{tpu_custom_call.1} parent=1 // pred_check
      _
    $region3: #{tpu_custom_call.1} parent=1 // pred_check_branch
      %11 = sbr.rel (0) target = $region5
    $region4: #{tpu_custom_call.1} parent=1 // pred_region
      %s12 = sadd.s32 0, 0
      %s13 = smul.u32 2, %s12
      %15 = vsyncadd [#allocation3], 0
      %s16 = smul.addr %s13, 8
      %s17 = scalar_lea.hbm %s0, %s16
      %s18 = sshll.u32 %s17, 4
      %s19 = int_to_ptr.hbm [resolvable:$true] %s18
      %s20 = sshll.u32 [#allocation2], 4
      %s21 = int_to_ptr.vmem [resolvable:$true] %s20
      %26 = dma.hbm_to_vmem [thread:$0]  %s19, 256, %s21, [#allocation3], 128, 128, 8
    $region5: #{tpu_custom_call.1} parent=1 // pred_fallthru
      _
    // Predicated region
    $region6: #{tpu_custom_call.1} parent=1 // pred_check
      _
    $region7: #{tpu_custom_call.1} parent=1 // pred_check_branch
      %28 = sbr.rel (0) target = $region9
    $region8: #{tpu_custom_call.1} parent=1 // pred_region
      %s29 = sadd.s32 0, 0
      %s30 = smul.u32 2, %s29
      %32 = vsyncadd [#allocation6], 0
      %s33 = smul.addr %s30, 8
      %s34 = scalar_lea.hbm %s1, %s33
      %s35 = sshll.u32 %s34, 4
      %s36 = int_to_ptr.hbm [resolvable:$true] %s35
      %s37 = sshll.u32 [#allocation5], 4
      %s38 = int_to_ptr.vmem [resolvable:$true] %s37
      %43 = dma.hbm_to_vmem [thread:$0]  %s36, 256, %s38, [#allocation6], 128, 128, 8
    $region9: #{tpu_custom_call.1} parent=1 // pred_fallthru
      _
    // Predicated region
    $region10: #{tpu_custom_call.1} parent=1 // pred_check
      _
    $region11: #{tpu_custom_call.1} parent=1 // pred_check_branch
      %45 = sbr.rel (0) target = $region13
    $region12: #{tpu_custom_call.1} parent=1 // pred_region
      %47 = dma.done [#allocation3], 256
    $region13: #{tpu_custom_call.1} parent=1 // pred_fallthru
      _
    // Predicated region
    $region14: #{tpu_custom_call.1} parent=1 // pred_check
      _
    $region15: #{tpu_custom_call.1} parent=1 // pred_check_branch
      %49 = sbr.rel (0) target = $region17
    $region16: #{tpu_custom_call.1} parent=1 // pred_region
      %51 = dma.done [#allocation6], 256
    $region17: #{tpu_custom_call.1} parent=1 // pred_fallthru
      _
    %s52 = sadd.s32 0, 0
    %s53 = smul.u32 2, %s52
    %s54 = sadd.s32 0, 0
    %s55 = smul.u32 2, %s54
    %p56 = scmp.eq.s32.totalorder 0, 0
    // Predicated region
    $region18: #{tpu_custom_call.1} parent=1 // pred_check
      %p57 = pneg %p56
    $region19: #{tpu_custom_call.1} parent=1 // pred_check_branch
      %59 = sbr.rel (%p57) target = $region21
    $region20: #{tpu_custom_call.1} parent=1 // pred_region
      %60 = vst [vmem:[#allocation7] sm:$0xff] 0.0
      %61 = vst [vmem:[#allocation7 + $0x8] sm:$0xff] 0.0
      %62 = vst [vmem:[#allocation7 + $0x10] sm:$0xff] 0.0
      %63 = vst [vmem:[#allocation7 + $0x18] sm:$0xff] 0.0
    $region21: #{tpu_custom_call.1} parent=1 // pred_fallthru
      _
    %v64 = vld [vmem:[#allocation2] sm:$0xff]
    %v65 = vld [vmem:[#allocation2 + $0x8] sm:$0xff]
    %v66 = vld [vmem:[#allocation5] sm:$0xff]
    %v67 = vld [vmem:[#allocation5 + $0x8] sm:$0xff]
    %v68 = vlog2.pop %v64
    %v69 = vmul.f32 %v68, 0.6931472
    %v70 = vlog2.pop %v65
    %v71 = vmul.f32 %v70, 0.6931472
    %v72 = vmax.f32 %v69, -100.0
    %v73 = vmax.f32 %v71, -100.0
    %v74 = vsub.f32 1.0, %v64
    %v75 = vsub.f32 1.0, %v65
    %v76 = vlog2.pop %v74
    %v77 = vmul.f32 %v76, 0.6931472
    %v78 = vlog2.pop %v75
    %v79 = vmul.f32 %v78, 0.6931472
    %v80 = vmax.f32 %v77, -100.0
    %v81 = vmax.f32 %v79, -100.0
    %v82 = vsub.f32 %v72, %v80
    %v83 = vsub.f32 %v73, %v81
    %v84 = vmul.f32 %v66, %v82
    %v85 = vmul.f32 %v67, %v83
    %v86 = vadd.f32 %v80, %v84
    %v87 = vadd.f32 %v81, %v85
    %v88 = vld [vmem:[#allocation7] sm:$0xff]
    %v89 = vadd.f32 %v86, %v87
    %v90 = vadd.f32 %v88, %v89
    %91 = vst [vmem:[#allocation7] sm:$0xff] %v90
    %vm92 = vcmp.eq.f32.partialorder %v66, 1.0
    %vm93 = vcmp.eq.f32.partialorder %v67, 1.0
    %s94 = scalar_lea.vmem [#allocation7], 8
    %v95 = vld [vmem:[%s94] sm:$0xff]
    %v96 = vsel %vm92, %v64, 0.0
    %v97 = vsel %vm93, %v65, 0.0
    %v98 = vadd.f32 %v96, %v97
    %v99 = vadd.f32 %v95, %v98
    %100 = vst [vmem:[%s94] sm:$0xff] %v99
    %s101 = scalar_lea.vmem [#allocation7], 16
    %v102 = vld [vmem:[%s101] sm:$0xff]
    %v103 = vadd.f32 %v64, %v65
    %v104 = vadd.f32 %v102, %v103
    %105 = vst [vmem:[%s101] sm:$0xff] %v104
    %s106 = scalar_lea.vmem [#allocation7], 24
    %v107 = vld [vmem:[%s106] sm:$0xff]
    %v108 = vsel %vm92, 1.0, 0.0
    %v109 = vsel %vm93, 1.0, 0.0
    %v110 = vadd.f32 %v108, %v109
    %v111 = vadd.f32 %v107, %v110
    %112 = vst [vmem:[%s106] sm:$0xff] %v111
    // Predicated region
    $region22: #{tpu_custom_call.1} parent=1 // pred_check
      _
    $region23: #{tpu_custom_call.1} parent=1 // pred_check_branch
      %114 = sbr.rel (0) target = $region25
    $region24: #{tpu_custom_call.1} parent=1 // pred_region
      %116 = vsyncadd [#allocation4], 0
      %s117 = sshll.u32 [#allocation7], 4
      %s118 = int_to_ptr.vmem [resolvable:$true] %s117
      %s119 = sshll.u32 %s2, 4
      %s120 = int_to_ptr.hbm [resolvable:$true] %s119
      %125 = dma.vmem_to_hbm [thread:$0]  %s118, 512, %s120, [#allocation4], 128, 128, 8
    $region25: #{tpu_custom_call.1} parent=1 // pred_fallthru
      _
    // Predicated region
    $region26: #{tpu_custom_call.1} parent=1 // pred_check
      _
    $region27: #{tpu_custom_call.1} parent=1 // pred_check_branch
      %127 = sbr.rel (0) target = $region29
    $region28: #{tpu_custom_call.1} parent=1 // pred_region
      %129 = dma.done [#allocation4], 512
    $region29: #{tpu_custom_call.1} parent=1 // pred_fallthru
      _
    %130 = vsyncpa [#allocation3], 1
    %131 = vsyncpa [#allocation6], 1
    %132 = vsyncpa [#allocation4], 1

</llo_original>
